<compile_context>
chip_gen: v5e
topology: v5e:2x2
jax: 0.10.0
libtpu: 0.0.40
codegen_flags: <defaults>
</compile_context>

<pallas_src>
import numpy as np

import jax
import jax.numpy as jnp
from jax.experimental import pallas as pl
from jax.experimental.pallas import tpu as pltpu


# ---------------------------------------------------------------------------
# Fused attention1d + dynamic-conv kernel (grid over batch blocks)
# ---------------------------------------------------------------------------
def _make_fused_kernel(*, K, ks, Cin, dilation, L, Lout, batch_block, use_bias,
                       temperature, compute_dtype):
    inv_L = 1.0 / float(L)              # AdaptiveAvgPool over the ORIGINAL length (pad is zeros)
    inv_t = 1.0 / float(temperature)

    def kernel(x_ref, fc1t_ref, fc2t_ref, fc2b_ref, w_ref, bt_ref, o_ref, xcol_ref):
        # x_ref   : (BB, Cin, Lp)      zero-padded input block          (compute_dtype)
        # fc1t_ref: (Cin, hidden)      attention fc1 weight, transposed (f32)
        # fc2t_ref: (hidden, K)        attention fc2 weight, transposed (f32)
        # fc2b_ref: (1, K)             attention fc2 bias               (f32)
        # w_ref   : (K, Cout, ks*Cin)  expert filters, row r = j*Cin+c  (compute_dtype)
        # bt_ref  : (Cout, K)          expert biases, transposed        (f32)
        # o_ref   : (BB, Cout, Lout)   output block                     (f32)
        # xcol_ref: (ks*Cin, Lout)     im2col scratch                   (VMEM, compute_dtype)

        # ---- attention1d, fused: pool -> fc1 -> relu -> fc2 -> softmax(z / T) ----
        x = x_ref[...]                                                    # (BB, Cin, Lp)
        pooled = jnp.sum(x.astype(jnp.float32), axis=2) * inv_L           # (BB, Cin)
        h = jnp.dot(pooled, fc1t_ref[...], preferred_element_type=jnp.float32)
        h = jnp.maximum(h, 0.0)
        z = jnp.dot(h, fc2t_ref[...], preferred_element_type=jnp.float32) + fc2b_ref[...]
        z = z * inv_t
        z = z - jnp.max(z, axis=1, keepdims=True)
        e = jnp.exp(z)
        attn = e / jnp.sum(e, axis=1, keepdims=True)                      # (BB, K) f32

        w_all = w_ref[...]                                                # (K, Cout, ks*Cin)
        b_all = bt_ref[...] if use_bias else None                         # (Cout, K)

        for i in range(batch_block):
            a_i = attn[i:i + 1, :]                                        # (1, K)

            # Mix the K expert filters: K full-width broadcast-FMAs on the VPU
            # over the flattened (Cout, ks*Cin) weights, accumulated in f32.
            w_agg = a_i[0:1, 0:1] * w_all[0]
            for k in range(1, K):
                w_agg = w_agg + a_i[0:1, k:k + 1] * w_all[k]              # (Cout, ks*Cin) f32
            w_agg = w_agg.astype(compute_dtype)

            # im2col once: stack the ks dilated shifts into the scratch, then ONE
            # MXU matmul with contraction dim ks*Cin.
            x_i = x[i]                                                    # (Cin, Lp)
            for j in range(ks):
                xcol_ref[j * Cin:(j + 1) * Cin, :] = \
                    x_i[:, j * dilation: j * dilation + Lout]
            acc = jnp.dot(w_agg, xcol_ref[...],
                          preferred_element_type=jnp.float32)             # (Cout, Lout)

            if use_bias:
                b_agg = jnp.sum(b_all * a_i, axis=1, keepdims=True)       # (Cout, 1)
                acc = acc + b_agg

            o_ref[i] = acc.astype(o_ref.dtype)

    return kernel


# ---------------------------------------------------------------------------
# Wrapper
# ---------------------------------------------------------------------------
def dynamic_conv1d_forward(x, params, *, stride=1, padding=0, dilation=1, groups=1,
                           temperature=34, batch_block=None,
                           compute_dtype=jnp.bfloat16):
    """Forward pass of Dynamic_conv1d.  x: (B, Cin, L) float32 -> (B, Cout, Lout) float32."""
    # TODO(synk): stride > 1 and groups > 1 are not implemented in the Pallas conv kernel.
    assert stride == 1 and groups == 1

    B, Cin, L = x.shape
    weight = params["weight"]                              # (K, Cout, Cin, ks)
    K, Cout, _, ks = weight.shape
    bias = params.get("bias", None)
    fc1_w, fc2_w, fc2_b = params["fc1_w"], params["fc2_w"], params["fc2_b"]
    hidden = fc1_w.shape[0]

    if batch_block is None:
        # Pack a few samples per grid step (amortize ~0.35us/step pipeline overhead) while
        # keeping >=2 grid steps so the parallel batch axis can use both TCs on v7x.
        batch_block = 1
        for bb in (8, 4, 2):
            if B % bb == 0 and B // bb >= 2:
                batch_block = bb
                break
    assert B % batch_block == 0, (B, batch_block)

    Lp = L + 2 * padding
    Lout = (Lp - dilation * (ks - 1) - 1) // stride + 1

    # ---- layout prep (cheap XLA-side ops) ----
    x_p = jnp.pad(x, ((0, 0), (0, 0), (padding, padding))).astype(compute_dtype)
    # Expert filters flattened so that row r = j*Cin + c matches the im2col stack.
    w_flat = jnp.transpose(weight, (0, 1, 3, 2)).reshape(K, Cout, ks * Cin).astype(compute_dtype)
    fc1_t = fc1_w.T.astype(jnp.float32)                    # (Cin, hidden)
    fc2_t = fc2_w.T.astype(jnp.float32)                    # (hidden, K)
    fc2_b2 = fc2_b.reshape(1, K).astype(jnp.float32)
    use_bias = bias is not None
    b_t = (bias.T if use_bias else jnp.zeros((Cout, K))).astype(jnp.float32)   # (Cout, K)

    kernel = _make_fused_kernel(K=K, ks=ks, Cin=Cin, dilation=dilation, L=L, Lout=Lout,
                                batch_block=batch_block, use_bias=use_bias,
                                temperature=temperature, compute_dtype=compute_dtype)

    grid_spec = pltpu.PrefetchScalarGridSpec(
        num_scalar_prefetch=0,
        grid=(B // batch_block,),
        in_specs=[
            pl.BlockSpec((batch_block, Cin, Lp), lambda b: (b, 0, 0)),   # padded x (per block)
            pl.BlockSpec((Cin, hidden), lambda b: (0, 0)),               # fc1^T   (shared)
            pl.BlockSpec((hidden, K), lambda b: (0, 0)),                 # fc2^T   (shared)
            pl.BlockSpec((1, K), lambda b: (0, 0)),                      # fc2 bias (shared)
            pl.BlockSpec((K, Cout, ks * Cin), lambda b: (0, 0, 0)),      # expert filters (shared)
            pl.BlockSpec((Cout, K), lambda b: (0, 0)),                   # expert biases (shared)
        ],
        out_specs=pl.BlockSpec((batch_block, Cout, Lout), lambda b: (b, 0, 0)),
        scratch_shapes=[pltpu.VMEM((ks * Cin, Lout), compute_dtype)],    # im2col buffer
    )

    # Explicit VMEM budget: only raise the scoped limit when the blocks actually need it
    # (keeps defaults on v5e's 16 MiB / v6e's 32 MiB / v7x's 32 MiB-of-64 MiB).
    c_bytes = jnp.dtype(compute_dtype).itemsize
    est = (2 * batch_block * Cin * Lp * c_bytes            # x block, double-buffered
           + 2 * batch_block * Cout * Lout * 4             # out block, double-buffered
           + 2 * K * Cout * ks * Cin * c_bytes             # expert filters (constant index)
           + 2 * (Cin * hidden + hidden * K + K + Cout * K) * 4
           + ks * Cin * Lout * c_bytes)                    # im2col scratch
    compiler_kwargs = dict(dimension_semantics=("parallel",))
    if est > 12 * 1024 * 1024:
        compiler_kwargs["vmem_limit_bytes"] = min(int(est * 2) + (2 << 20), 96 * 1024 * 1024)

    out = pl.pallas_call(
        kernel,
        out_shape=jax.ShapeDtypeStruct((B, Cout, Lout), jnp.float32),
        grid_spec=grid_spec,
        compiler_params=pltpu.CompilerParams(**compiler_kwargs),
    )(x_p, fc1_t, fc2_t, fc2_b2, w_flat, b_t)
    return out


# ---------------------------------------------------------------------------
# Pure-JAX reference (mirrors the PyTorch forward; applies the same bf16 input/filter
# quantization as the wrapper so the comparison is apples-to-apples)
# ---------------------------------------------------------------------------
def reference_forward(x, params, *, stride, padding, dilation, groups, temperature,
                      compute_dtype=jnp.bfloat16):
    B, Cin, L = x.shape
    weight = params["weight"]
    K, Cout, _, ks = weight.shape
    hi = jax.lax.Precision.HIGHEST

    xq = x.astype(compute_dtype).astype(jnp.float32)
    wq = weight.astype(compute_dtype).astype(jnp.float32)

    pooled = jnp.mean(xq, axis=-1)                                   # AdaptiveAvgPool1d(1)
    h = jax.nn.relu(jnp.dot(pooled, params["fc1_w"].T, precision=hi))
    z = jnp.dot(h, params["fc2_w"].T, precision=hi) + params["fc2_b"][None, :]
    attn = jax.nn.softmax(z / temperature, axis=1)                   # (B, K)

    agg_w = jnp.matmul(attn, wq.reshape(K, -1), precision=hi)
    agg_w = agg_w.reshape(B * Cout, Cin // groups, ks)
    agg_w = agg_w.astype(compute_dtype).astype(jnp.float32)          # kernel mixes then casts to bf16
    xg = xq.reshape(1, B * Cin, L)
    out = jax.lax.conv_general_dilated(
        xg, agg_w,
        window_strides=(stride,),
        padding=[(padding, padding)],
        rhs_dilation=(dilation,),
        dimension_numbers=("NCH", "OIH", "NCH"),
        feature_group_count=B * groups,
        precision=hi,
    )
    if params.get("bias", None) is not None:
        agg_b = jnp.matmul(attn, params["bias"], precision=hi).reshape(-1)
        out = out + agg_b[None, :, None]
    return out.reshape(B, Cout, -1)


# ---------------------------------------------------------------------------
if __name__ == "__main__":
    key = jax.random.PRNGKey(0)
    B, Cin, Cout, L, ks, K = 4, 4, 8, 16, 3, 4
    ratio, temperature = 0.25, 34
    hidden = int(Cin * ratio) + 1 if Cin != 3 else K                 # attention1d hidden_planes

    k1, k2, k3, k4, k5 = jax.random.split(key, 5)
    x = jax.random.normal(k1, (B, Cin, L), jnp.float32)

    # attention1d params (1x1 Conv1d weights stored as 2D matrices), kaiming-style scales
    fc1_w = jax.random.normal(k2, (hidden, Cin), jnp.float32) * np.sqrt(2.0 / hidden)
    fc2_w = jax.random.normal(k3, (K, hidden), jnp.float32) * np.sqrt(2.0 / K)
    fc2_b = jnp.zeros((K,), jnp.float32)                             # nn.init.constant_(bias, 0)

    # dynamic conv params: kaiming_uniform-ish weight; deterministic bias
    bound = float(np.sqrt(6.0 / (Cin * ks)))
    weight = jax.random.uniform(k4, (K, Cout, Cin, ks), jnp.float32, -bound, bound)
    bias = jax.random.normal(k5, (K, Cout), jnp.float32) * 0.1

    params = dict(fc1_w=fc1_w, fc2_w=fc2_w, fc2_b=fc2_b, weight=weight, bias=bias)

    # Exercise both the batch-blocked path and dilation/padding handling.
    for (pad, dil, bb) in [(1, 1, 2), (2, 2, 1)]:
        out = dynamic_conv1d_forward(x, params, stride=1, padding=pad, dilation=dil, groups=1,
                                     temperature=temperature, batch_block=bb)
        out = jax.block_until_ready(out)

        ref = reference_forward(x, params, stride=1, padding=pad, dilation=dil, groups=1,
                                temperature=temperature)
        Lout = (L + 2 * pad - dil * (ks - 1) - 1) + 1
        assert out.shape == (B, Cout, Lout), out.shape
        # bf16 inputs/filters with f32 accumulation on both sides -> differences are only
        # accumulation-order / rare bf16 rounding-boundary effects.
        np.testing.assert_allclose(np.asarray(out), np.asarray(ref), rtol=1e-2, atol=1e-2)

    print("KERNEL_OK")
</pallas_src>

<mosaic_0001>
module attributes {stable_mosaic.version = 11 : i64} {
  func.func @kernel(%arg0: i32, %arg1: memref<2x4x18xbf16, #tpu.memory_space<vmem>>, %arg2: memref<4x2xf32, #tpu.memory_space<vmem>>, %arg3: memref<2x4xf32, #tpu.memory_space<vmem>>, %arg4: memref<1x4xf32, #tpu.memory_space<vmem>>, %arg5: memref<4x8x12xbf16, #tpu.memory_space<vmem>>, %arg6: memref<8x4xf32, #tpu.memory_space<vmem>>, %arg7: memref<2x8x16xf32, #tpu.memory_space<vmem>>, %arg8: memref<12x16xbf16, #tpu.memory_space<vmem>>) attributes {dimension_semantics = [#tpu.dimension_semantics<parallel>], iteration_bounds = array<i64: 2>, scalar_prefetch = 0 : i64, scratch_operands = 1 : i64, tpu.core_type = #tpu.core_type<tc>, window_params = [{transform_indices = @transform_0, window_bounds = array<i64: 2, 4, 18>}, {pipeline_mode = #tpu.pipeline_mode<synchronous>, transform_indices = @transform_1, window_bounds = array<i64: 4, 2>}, {pipeline_mode = #tpu.pipeline_mode<synchronous>, transform_indices = @transform_2, window_bounds = array<i64: 2, 4>}, {pipeline_mode = #tpu.pipeline_mode<synchronous>, transform_indices = @transform_3, window_bounds = array<i64: 1, 4>}, {pipeline_mode = #tpu.pipeline_mode<synchronous>, transform_indices = @transform_4, window_bounds = array<i64: 4, 8, 12>}, {pipeline_mode = #tpu.pipeline_mode<synchronous>, transform_indices = @transform_5, window_bounds = array<i64: 8, 4>}, {transform_indices = @transform_6, window_bounds = array<i64: 2, 8, 16>}]} {
    %c0 = arith.constant 0 : index
    %c0_0 = arith.constant 0 : index
    %c0_1 = arith.constant 0 : index
    %0 = vector.load %arg1[%c0, %c0_0, %c0_1] : memref<2x4x18xbf16, #tpu.memory_space<vmem>>, vector<2x4x18xbf16>
    %1 = arith.extf %0 : vector<2x4x18xbf16> to vector<2x4x18xf32>
    %cst = arith.constant dense<0.000000e+00> : vector<2x4xf32>
    %2 = vector.multi_reduction <add>, %1, %cst [2] : vector<2x4x18xf32> to vector<2x4xf32>
    %cst_2 = arith.constant 6.250000e-02 : f32
    %3 = vector.broadcast %cst_2 : f32 to vector<2x4xf32>
    %4 = arith.mulf %2, %3 : vector<2x4xf32>
    %c0_3 = arith.constant 0 : index
    %c0_4 = arith.constant 0 : index
    %5 = vector.load %arg2[%c0_3, %c0_4] : memref<4x2xf32, #tpu.memory_space<vmem>>, vector<4x2xf32>
    %cst_5 = arith.constant dense<0.000000e+00> : vector<2x2xf32>
    %6 = tpu.matmul %4, %5, %cst_5 {dimension_numbers = #tpu.dot_dimension_numbers<[1], [0], [0], [1], [0, 0, 1, 1], [], []>} : vector<2x4xf32>, vector<4x2xf32>, vector<2x2xf32> -> vector<2x2xf32>
    %cst_6 = arith.constant 0.000000e+00 : f32
    %7 = vector.broadcast %cst_6 : f32 to vector<2x2xf32>
    %8 = arith.maximumf %6, %7 : vector<2x2xf32>
    %c0_7 = arith.constant 0 : index
    %c0_8 = arith.constant 0 : index
    %9 = vector.load %arg3[%c0_7, %c0_8] : memref<2x4xf32, #tpu.memory_space<vmem>>, vector<2x4xf32>
    %cst_9 = arith.constant dense<0.000000e+00> : vector<2x4xf32>
    %10 = tpu.matmul %8, %9, %cst_9 {dimension_numbers = #tpu.dot_dimension_numbers<[1], [0], [0], [1], [0, 0, 1, 1], [], []>} : vector<2x2xf32>, vector<2x4xf32>, vector<2x4xf32> -> vector<2x4xf32>
    %c0_10 = arith.constant 0 : index
    %c0_11 = arith.constant 0 : index
    %11 = vector.load %arg4[%c0_10, %c0_11] : memref<1x4xf32, #tpu.memory_space<vmem>>, vector<1x4xf32>
    %12 = vector.broadcast %11 : vector<1x4xf32> to vector<2x4xf32>
    %13 = arith.addf %10, %12 : vector<2x4xf32>
    %cst_12 = arith.constant 0.0294117648 : f32
    %14 = vector.broadcast %cst_12 : f32 to vector<2x4xf32>
    %15 = arith.mulf %13, %14 : vector<2x4xf32>
    %cst_13 = arith.constant dense<0xFF800000> : vector<2xf32>
    %16 = vector.multi_reduction <maximumf>, %15, %cst_13 [1] : vector<2x4xf32> to vector<2xf32>
    %17 = vector.shape_cast %16 : vector<2xf32> to vector<2x1xf32>
    %18 = vector.broadcast %17 : vector<2x1xf32> to vector<2x4xf32>
    %19 = arith.subf %15, %18 : vector<2x4xf32>
    %20 = math.exp %19 : vector<2x4xf32>
    %cst_14 = arith.constant dense<0.000000e+00> : vector<2xf32>
    %21 = vector.multi_reduction <add>, %20, %cst_14 [1] : vector<2x4xf32> to vector<2xf32>
    %22 = vector.shape_cast %21 : vector<2xf32> to vector<2x1xf32>
    %23 = vector.broadcast %22 : vector<2x1xf32> to vector<2x4xf32>
    %24 = arith.divf %20, %23 : vector<2x4xf32>
    %c0_15 = arith.constant 0 : index
    %c0_16 = arith.constant 0 : index
    %c0_17 = arith.constant 0 : index
    %25 = vector.load %arg5[%c0_15, %c0_16, %c0_17] : memref<4x8x12xbf16, #tpu.memory_space<vmem>>, vector<4x8x12xbf16>
    %c0_18 = arith.constant 0 : index
    %c0_19 = arith.constant 0 : index
    %26 = vector.load %arg6[%c0_18, %c0_19] : memref<8x4xf32, #tpu.memory_space<vmem>>, vector<8x4xf32>
    %27 = vector.extract_strided_slice %24 {offsets = [0, 0], sizes = [1, 4], strides = [1, 1]} : vector<2x4xf32> to vector<1x4xf32>
    %28 = vector.extract_strided_slice %27 {offsets = [0, 0], sizes = [1, 1], strides = [1, 1]} : vector<1x4xf32> to vector<1x1xf32>
    %29 = vector.extract_strided_slice %25 {offsets = [0, 0, 0], sizes = [1, 8, 12], strides = [1, 1, 1]} : vector<4x8x12xbf16> to vector<1x8x12xbf16>
    %30 = vector.shape_cast %29 : vector<1x8x12xbf16> to vector<8x12xbf16>
    %31 = arith.extf %30 : vector<8x12xbf16> to vector<8x12xf32>
    %32 = vector.broadcast %28 : vector<1x1xf32> to vector<8x12xf32>
    %33 = arith.mulf %32, %31 : vector<8x12xf32>
    %34 = vector.extract_strided_slice %27 {offsets = [0, 1], sizes = [1, 1], strides = [1, 1]} : vector<1x4xf32> to vector<1x1xf32>
    %35 = vector.extract_strided_slice %25 {offsets = [1, 0, 0], sizes = [1, 8, 12], strides = [1, 1, 1]} : vector<4x8x12xbf16> to vector<1x8x12xbf16>
    %36 = vector.shape_cast %35 : vector<1x8x12xbf16> to vector<8x12xbf16>
    %37 = arith.extf %36 : vector<8x12xbf16> to vector<8x12xf32>
    %38 = vector.broadcast %34 : vector<1x1xf32> to vector<8x12xf32>
    %39 = arith.mulf %38, %37 : vector<8x12xf32>
    %40 = arith.addf %33, %39 : vector<8x12xf32>
    %41 = vector.extract_strided_slice %27 {offsets = [0, 2], sizes = [1, 1], strides = [1, 1]} : vector<1x4xf32> to vector<1x1xf32>
    %42 = vector.extract_strided_slice %25 {offsets = [2, 0, 0], sizes = [1, 8, 12], strides = [1, 1, 1]} : vector<4x8x12xbf16> to vector<1x8x12xbf16>
    %43 = vector.shape_cast %42 : vector<1x8x12xbf16> to vector<8x12xbf16>
    %44 = arith.extf %43 : vector<8x12xbf16> to vector<8x12xf32>
    %45 = vector.broadcast %41 : vector<1x1xf32> to vector<8x12xf32>
    %46 = arith.mulf %45, %44 : vector<8x12xf32>
    %47 = arith.addf %40, %46 : vector<8x12xf32>
    %48 = vector.extract_strided_slice %27 {offsets = [0, 3], sizes = [1, 1], strides = [1, 1]} : vector<1x4xf32> to vector<1x1xf32>
    %49 = vector.extract_strided_slice %25 {offsets = [3, 0, 0], sizes = [1, 8, 12], strides = [1, 1, 1]} : vector<4x8x12xbf16> to vector<1x8x12xbf16>
    %50 = vector.shape_cast %49 : vector<1x8x12xbf16> to vector<8x12xbf16>
    %51 = arith.extf %50 : vector<8x12xbf16> to vector<8x12xf32>
    %52 = vector.broadcast %48 : vector<1x1xf32> to vector<8x12xf32>
    %53 = arith.mulf %52, %51 : vector<8x12xf32>
    %54 = arith.addf %47, %53 : vector<8x12xf32>
    %55 = arith.truncf %54 : vector<8x12xf32> to vector<8x12xbf16>
    %56 = vector.extract_strided_slice %0 {offsets = [0, 0, 0], sizes = [1, 4, 18], strides = [1, 1, 1]} : vector<2x4x18xbf16> to vector<1x4x18xbf16>
    %57 = vector.shape_cast %56 : vector<1x4x18xbf16> to vector<4x18xbf16>
    %58 = vector.extract_strided_slice %57 {offsets = [0, 0], sizes = [4, 16], strides = [1, 1]} : vector<4x18xbf16> to vector<4x16xbf16>
    %c0_20 = arith.constant 0 : index
    %c0_21 = arith.constant 0 : index
    %59 = vector.load %arg8[%c0_20, %c0_21] : memref<12x16xbf16, #tpu.memory_space<vmem>>, vector<4x16xbf16>
    tpu.vector_store %arg8[%c0_20, %c0_21], %58 {strides = array<i32>} : memref<12x16xbf16, #tpu.memory_space<vmem>>, vector<4x16xbf16>,
    %60 = vector.extract_strided_slice %57 {offsets = [0, 1], sizes = [4, 16], strides = [1, 1]} : vector<4x18xbf16> to vector<4x16xbf16>
    %c4 = arith.constant 4 : index
    %c0_22 = arith.constant 0 : index
    %61 = vector.load %arg8[%c4, %c0_22] : memref<12x16xbf16, #tpu.memory_space<vmem>>, vector<4x16xbf16>
    tpu.vector_store %arg8[%c4, %c0_22], %60 {strides = array<i32>} : memref<12x16xbf16, #tpu.memory_space<vmem>>, vector<4x16xbf16>,
    %62 = vector.extract_strided_slice %57 {offsets = [0, 2], sizes = [4, 16], strides = [1, 1]} : vector<4x18xbf16> to vector<4x16xbf16>
    %c8 = arith.constant 8 : index
    %c0_23 = arith.constant 0 : index
    %63 = vector.load %arg8[%c8, %c0_23] : memref<12x16xbf16, #tpu.memory_space<vmem>>, vector<4x16xbf16>
    tpu.vector_store %arg8[%c8, %c0_23], %62 {strides = array<i32>} : memref<12x16xbf16, #tpu.memory_space<vmem>>, vector<4x16xbf16>,
    %c0_24 = arith.constant 0 : index
    %c0_25 = arith.constant 0 : index
    %64 = vector.load %arg8[%c0_24, %c0_25] : memref<12x16xbf16, #tpu.memory_space<vmem>>, vector<12x16xbf16>
    %cst_26 = arith.constant dense<0.000000e+00> : vector<8x16xf32>
    %65 = tpu.matmul %55, %64, %cst_26 {dimension_numbers = #tpu.dot_dimension_numbers<[1], [0], [0], [1], [0, 0, 1, 1], [], []>} : vector<8x12xbf16>, vector<12x16xbf16>, vector<8x16xf32> -> vector<8x16xf32>
    %66 = vector.broadcast %27 : vector<1x4xf32> to vector<8x4xf32>
    %67 = arith.mulf %26, %66 : vector<8x4xf32>
    %cst_27 = arith.constant dense<0.000000e+00> : vector<8xf32>
    %68 = vector.multi_reduction <add>, %67, %cst_27 [1] : vector<8x4xf32> to vector<8xf32>
    %69 = vector.shape_cast %68 : vector<8xf32> to vector<8x1xf32>
    %70 = vector.broadcast %69 : vector<8x1xf32> to vector<8x16xf32>
    %71 = arith.addf %65, %70 : vector<8x16xf32>
    %c0_28 = arith.constant 0 : index
    %c0_29 = arith.constant 0 : index
    %c0_30 = arith.constant 0 : index
    %72 = vector.load %arg7[%c0_28, %c0_29, %c0_30] : memref<2x8x16xf32, #tpu.memory_space<vmem>>, vector<1x8x16xf32>
    %73 = vector.shape_cast %72 : vector<1x8x16xf32> to vector<8x16xf32>
    %74 = vector.shape_cast %71 : vector<8x16xf32> to vector<1x8x16xf32>
    tpu.vector_store %arg7[%c0_28, %c0_29, %c0_30], %74 {strides = array<i32>} : memref<2x8x16xf32, #tpu.memory_space<vmem>>, vector<1x8x16xf32>,
    %75 = vector.extract_strided_slice %24 {offsets = [1, 0], sizes = [1, 4], strides = [1, 1]} : vector<2x4xf32> to vector<1x4xf32>
    %76 = vector.extract_strided_slice %75 {offsets = [0, 0], sizes = [1, 1], strides = [1, 1]} : vector<1x4xf32> to vector<1x1xf32>
    %77 = vector.extract_strided_slice %25 {offsets = [0, 0, 0], sizes = [1, 8, 12], strides = [1, 1, 1]} : vector<4x8x12xbf16> to vector<1x8x12xbf16>
    %78 = vector.shape_cast %77 : vector<1x8x12xbf16> to vector<8x12xbf16>
    %79 = arith.extf %78 : vector<8x12xbf16> to vector<8x12xf32>
    %80 = vector.broadcast %76 : vector<1x1xf32> to vector<8x12xf32>
    %81 = arith.mulf %80, %79 : vector<8x12xf32>
    %82 = vector.extract_strided_slice %75 {offsets = [0, 1], sizes = [1, 1], strides = [1, 1]} : vector<1x4xf32> to vector<1x1xf32>
    %83 = vector.extract_strided_slice %25 {offsets = [1, 0, 0], sizes = [1, 8, 12], strides = [1, 1, 1]} : vector<4x8x12xbf16> to vector<1x8x12xbf16>
    %84 = vector.shape_cast %83 : vector<1x8x12xbf16> to vector<8x12xbf16>
    %85 = arith.extf %84 : vector<8x12xbf16> to vector<8x12xf32>
    %86 = vector.broadcast %82 : vector<1x1xf32> to vector<8x12xf32>
    %87 = arith.mulf %86, %85 : vector<8x12xf32>
    %88 = arith.addf %81, %87 : vector<8x12xf32>
    %89 = vector.extract_strided_slice %75 {offsets = [0, 2], sizes = [1, 1], strides = [1, 1]} : vector<1x4xf32> to vector<1x1xf32>
    %90 = vector.extract_strided_slice %25 {offsets = [2, 0, 0], sizes = [1, 8, 12], strides = [1, 1, 1]} : vector<4x8x12xbf16> to vector<1x8x12xbf16>
    %91 = vector.shape_cast %90 : vector<1x8x12xbf16> to vector<8x12xbf16>
    %92 = arith.extf %91 : vector<8x12xbf16> to vector<8x12xf32>
    %93 = vector.broadcast %89 : vector<1x1xf32> to vector<8x12xf32>
    %94 = arith.mulf %93, %92 : vector<8x12xf32>
    %95 = arith.addf %88, %94 : vector<8x12xf32>
    %96 = vector.extract_strided_slice %75 {offsets = [0, 3], sizes = [1, 1], strides = [1, 1]} : vector<1x4xf32> to vector<1x1xf32>
    %97 = vector.extract_strided_slice %25 {offsets = [3, 0, 0], sizes = [1, 8, 12], strides = [1, 1, 1]} : vector<4x8x12xbf16> to vector<1x8x12xbf16>
    %98 = vector.shape_cast %97 : vector<1x8x12xbf16> to vector<8x12xbf16>
    %99 = arith.extf %98 : vector<8x12xbf16> to vector<8x12xf32>
    %100 = vector.broadcast %96 : vector<1x1xf32> to vector<8x12xf32>
    %101 = arith.mulf %100, %99 : vector<8x12xf32>
    %102 = arith.addf %95, %101 : vector<8x12xf32>
    %103 = arith.truncf %102 : vector<8x12xf32> to vector<8x12xbf16>
    %104 = vector.extract_strided_slice %0 {offsets = [1, 0, 0], sizes = [1, 4, 18], strides = [1, 1, 1]} : vector<2x4x18xbf16> to vector<1x4x18xbf16>
    %105 = vector.shape_cast %104 : vector<1x4x18xbf16> to vector<4x18xbf16>
    %106 = vector.extract_strided_slice %105 {offsets = [0, 0], sizes = [4, 16], strides = [1, 1]} : vector<4x18xbf16> to vector<4x16xbf16>
    %c0_31 = arith.constant 0 : index
    %c0_32 = arith.constant 0 : index
    %107 = vector.load %arg8[%c0_31, %c0_32] : memref<12x16xbf16, #tpu.memory_space<vmem>>, vector<4x16xbf16>
    tpu.vector_store %arg8[%c0_31, %c0_32], %106 {strides = array<i32>} : memref<12x16xbf16, #tpu.memory_space<vmem>>, vector<4x16xbf16>,
    %108 = vector.extract_strided_slice %105 {offsets = [0, 1], sizes = [4, 16], strides = [1, 1]} : vector<4x18xbf16> to vector<4x16xbf16>
    %c4_33 = arith.constant 4 : index
    %c0_34 = arith.constant 0 : index
    %109 = vector.load %arg8[%c4_33, %c0_34] : memref<12x16xbf16, #tpu.memory_space<vmem>>, vector<4x16xbf16>
    tpu.vector_store %arg8[%c4_33, %c0_34], %108 {strides = array<i32>} : memref<12x16xbf16, #tpu.memory_space<vmem>>, vector<4x16xbf16>,
    %110 = vector.extract_strided_slice %105 {offsets = [0, 2], sizes = [4, 16], strides = [1, 1]} : vector<4x18xbf16> to vector<4x16xbf16>
    %c8_35 = arith.constant 8 : index
    %c0_36 = arith.constant 0 : index
    %111 = vector.load %arg8[%c8_35, %c0_36] : memref<12x16xbf16, #tpu.memory_space<vmem>>, vector<4x16xbf16>
    tpu.vector_store %arg8[%c8_35, %c0_36], %110 {strides = array<i32>} : memref<12x16xbf16, #tpu.memory_space<vmem>>, vector<4x16xbf16>,
    %c0_37 = arith.constant 0 : index
    %c0_38 = arith.constant 0 : index
    %112 = vector.load %arg8[%c0_37, %c0_38] : memref<12x16xbf16, #tpu.memory_space<vmem>>, vector<12x16xbf16>
    %cst_39 = arith.constant dense<0.000000e+00> : vector<8x16xf32>
    %113 = tpu.matmul %103, %112, %cst_39 {dimension_numbers = #tpu.dot_dimension_numbers<[1], [0], [0], [1], [0, 0, 1, 1], [], []>} : vector<8x12xbf16>, vector<12x16xbf16>, vector<8x16xf32> -> vector<8x16xf32>
    %114 = vector.broadcast %75 : vector<1x4xf32> to vector<8x4xf32>
    %115 = arith.mulf %26, %114 : vector<8x4xf32>
    %cst_40 = arith.constant dense<0.000000e+00> : vector<8xf32>
    %116 = vector.multi_reduction <add>, %115, %cst_40 [1] : vector<8x4xf32> to vector<8xf32>
    %117 = vector.shape_cast %116 : vector<8xf32> to vector<8x1xf32>
    %118 = vector.broadcast %117 : vector<8x1xf32> to vector<8x16xf32>
    %119 = arith.addf %113, %118 : vector<8x16xf32>
    %c1 = arith.constant 1 : index
    %c0_41 = arith.constant 0 : index
    %c0_42 = arith.constant 0 : index
    %120 = vector.load %arg7[%c1, %c0_41, %c0_42] : memref<2x8x16xf32, #tpu.memory_space<vmem>>, vector<1x8x16xf32>
    %121 = vector.shape_cast %120 : vector<1x8x16xf32> to vector<8x16xf32>
    %122 = vector.shape_cast %119 : vector<8x16xf32> to vector<1x8x16xf32>
    tpu.vector_store %arg7[%c1, %c0_41, %c0_42], %122 {strides = array<i32>} : memref<2x8x16xf32, #tpu.memory_space<vmem>>, vector<1x8x16xf32>,
    return
  }
  func.func @transform_0(%arg0: i32) -> (i32, i32, i32) {
    %c0_i32 = arith.constant 0 : i32
    %c0_i32_0 = arith.constant 0 : i32
    %c0_i32_1 = arith.constant 0 : i32
    return %arg0, %c0_i32, %c0_i32_0 : i32, i32, i32
  }
  func.func @transform_1(%arg0: i32) -> (i32, i32) {
    %c0_i32 = arith.constant 0 : i32
    %c0_i32_0 = arith.constant 0 : i32
    %c0_i32_1 = arith.constant 0 : i32
    return %c0_i32, %c0_i32_0 : i32, i32
  }
  func.func @transform_2(%arg0: i32) -> (i32, i32) {
    %c0_i32 = arith.constant 0 : i32
    %c0_i32_0 = arith.constant 0 : i32
    %c0_i32_1 = arith.constant 0 : i32
    return %c0_i32, %c0_i32_0 : i32, i32
  }
  func.func @transform_3(%arg0: i32) -> (i32, i32) {
    %c0_i32 = arith.constant 0 : i32
    %c0_i32_0 = arith.constant 0 : i32
    %c0_i32_1 = arith.constant 0 : i32
    return %c0_i32, %c0_i32_0 : i32, i32
  }
  func.func @transform_4(%arg0: i32) -> (i32, i32, i32) {
    %c0_i32 = arith.constant 0 : i32
    %c0_i32_0 = arith.constant 0 : i32
    %c0_i32_1 = arith.constant 0 : i32
    %c0_i32_2 = arith.constant 0 : i32
    return %c0_i32, %c0_i32_0, %c0_i32_1 : i32, i32, i32
  }
  func.func @transform_5(%arg0: i32) -> (i32, i32) {
    %c0_i32 = arith.constant 0 : i32
    %c0_i32_0 = arith.constant 0 : i32
    %c0_i32_1 = arith.constant 0 : i32
    return %c0_i32, %c0_i32_0 : i32, i32
  }
  func.func @transform_6(%arg0: i32) -> (i32, i32, i32) {
    %c0_i32 = arith.constant 0 : i32
    %c0_i32_0 = arith.constant 0 : i32
    %c0_i32_1 = arith.constant 0 : i32
    return %arg0, %c0_i32, %c0_i32_0 : i32, i32, i32
  }
}

</mosaic_0001>

<llo_original>
// kernel: tpu_custom_call.1
$region0: #{tpu_custom_call.1}
  #allocation0 [shape = 'u32[]', space=smem, size = 0x4, offset = 0x4, fixed_abs, tag = 'smem constant byte address 0x4 - core index']
  #allocation1 [shape = 'u32[72,128]{1,0:T(1,128)}', space=vmem, size = 0x9000, scoped, tag = 'internal scratch']
  #allocation2 [shape = 'bf16[12,16]{1,0:T(8,128)(2,1)}', space=vmem, size = 0x1000, scoped, tag = 'scratch operand']
  %s0 = inlined_call_operand.vmem [shape: bf16[4,4,18], index: 0, kind: input, shape index: {}]
  %s1 = inlined_call_operand.vmem [shape: f32[4,2], index: 1, kind: input, shape index: {}]
  %s2 = inlined_call_operand.vmem [shape: f32[2,4], index: 2, kind: input, shape index: {}]
  %s3 = inlined_call_operand.vmem [shape: f32[1,4], index: 3, kind: input, shape index: {}]
  %s4 = inlined_call_operand.hbm [shape: bf16[4,8,12], index: 4, kind: input, shape index: {}]
  %s5 = inlined_call_operand.vmem [shape: f32[8,4], index: 5, kind: input, shape index: {}]
  %s6 = inlined_call_operand.hbm [shape: f32[4,8,16], index: 6, kind: output, shape index: {}]
  %s7 = sld [smem:[#allocation0]]
  $region61: #{tpu_custom_call.1} parent=0
    _
  %s9 = ssub.s32 1, %s7
  %s10 = scalar_select 0, %s9, %s7
  $region1: #{tpu_custom_call.1} parent=0
    #allocation3 [shape = 'u8[8192]{0}', space=vmem, size = 0x2000, scoped, tag = 'input window, operand 4, single buffered']
    #allocation4 [shape = 's32[2]{0}', space=sflag, size = 0x8, scoped, tag = 'scoped memory for tpu_custom_call.1']
    #allocation5 [shape = 's32[2]{0}', space=sflag, size = 0x8, scoped, tag = 'scoped memory for tpu_custom_call.1']
    #allocation6 [shape = 'u8[16384]{0}', space=vmem, size = 0x4000, scoped, tag = 'output window, operand 0']
    %11 = vsyncpa [#allocation4], 0
    %12 = vsyncpa [#allocation5], 0
    %s13 = scalar_lea.sflag [#allocation5], 1
    %14 = vsyncpa %s13, 0
    loop: start=0, step=1, limit=4
    $region2: #{tpu_custom_call.1} parent=1 // loop_pre_header
      _
    $region3: #{tpu_custom_call.1} parent=1 // loop_header
      %s16 = sphi 0, %s20
      %p17 = scmp.ge.s32.totalorder %s16, 4
      %s26 = sphi 0, %s28
      %s29 = sphi 0, %s26
      %s30 = sphi 0, %s29
      %s46 = sphi 0, %s30
      %s50 = sphi 0, %s50
      %s52 = sphi 0, %s50
      %s53 = sphi 0, %s52
      %s67 = sphi 0, %s53
      %s71 = sphi 0, %s71
      %s73 = sphi 0, %s71
      %s74 = sphi 0, %s73
      %s88 = sphi 0, %s74
      %s92 = sphi 0, %s92
      %s94 = sphi 0, %s92
      %s95 = sphi 0, %s94
      %s109 = sphi 0, %s95
      %s113 = sphi 0, %s113
      %s115 = sphi 0, %s113
      %s116 = sphi 0, %s115
      %s130 = sphi 0, %s116
      %s134 = sphi 0, %s134
      %s136 = sphi 0, %s134
      %s137 = sphi 0, %s136
      %s151 = sphi 0, %s137
      %s157 = sphi 0, %s159
      %s160 = sphi 0, %s157
      %s161 = sphi 0, %s160
      %s177 = sphi 0, %s161
    $region4: #{tpu_custom_call.1} parent=1 // loop_header_branch
      %19 = sbr.rel (%p17) target = $region8
    $region5: #{tpu_custom_call.1} parent=1 // loop_body
      %s21 = ssub.s32 %s16, 1
      %s22 = ssub.s32 %s16, 2
      %s23 = sadd.s32 %s16, 1
      %s24 = ssub.s32 %s16, %s23
      %p25 = scmp.eq.s32.totalorder %s24, 0
      %s27 = sadd.s32 %s26, 1
      %s28 = scalar_select %p25, %s26, %s27
      %p31 = pneg %p25
      %p32 = scmp.eq.s32.totalorder %s16, 1
      %p33 = por %p31, %p32
      %p34 = scmp.ne.s32.totalorder %s26, %s29
      %p35 = scmp.eq.s32.totalorder %s16, 0
      %p36 = por %p34, %p35
      %p37 = scmp.ne.s32.totalorder %s26, %s29
      %p38 = scmp.eq.s32.totalorder %s21, 1
      %p39 = por %p37, %p38
      %p40 = scmp.ne.s32.totalorder %s29, %s30
      %p41 = scmp.eq.s32.totalorder %s21, 0
      %p42 = por %p40, %p41
      %p43 = scmp.ne.s32.totalorder %s29, %s30
      %p44 = scmp.eq.s32.totalorder %s22, 1
      %p45 = por %p43, %p44
      %p47 = scmp.ne.s32.totalorder %s30, %s46
      %p48 = scmp.eq.s32.totalorder %s22, 0
      %p49 = por %p47, %p48
      %s51 = sadd.s32 %s50, 1
      %p54 = scmp.eq.s32.totalorder %s16, 1
      %p55 = scmp.ne.s32.totalorder %s50, %s52
      %p56 = scmp.eq.s32.totalorder %s16, 0
      %p57 = por %p55, %p56
      %p58 = scmp.ne.s32.totalorder %s50, %s52
      %p59 = scmp.eq.s32.totalorder %s21, 1
      %p60 = por %p58, %p59
      %p61 = scmp.ne.s32.totalorder %s52, %s53
      %p62 = scmp.eq.s32.totalorder %s21, 0
      %p63 = por %p61, %p62
      %p64 = scmp.ne.s32.totalorder %s52, %s53
      %p65 = scmp.eq.s32.totalorder %s22, 1
      %p66 = por %p64, %p65
      %p68 = scmp.ne.s32.totalorder %s53, %s67
      %p69 = scmp.eq.s32.totalorder %s22, 0
      %p70 = por %p68, %p69
      %s72 = sadd.s32 %s71, 1
      %p75 = scmp.eq.s32.totalorder %s16, 1
      %p76 = scmp.ne.s32.totalorder %s71, %s73
      %p77 = scmp.eq.s32.totalorder %s16, 0
      %p78 = por %p76, %p77
      %p79 = scmp.ne.s32.totalorder %s71, %s73
      %p80 = scmp.eq.s32.totalorder %s21, 1
      %p81 = por %p79, %p80
      %p82 = scmp.ne.s32.totalorder %s73, %s74
      %p83 = scmp.eq.s32.totalorder %s21, 0
      %p84 = por %p82, %p83
      %p85 = scmp.ne.s32.totalorder %s73, %s74
      %p86 = scmp.eq.s32.totalorder %s22, 1
      %p87 = por %p85, %p86
      %p89 = scmp.ne.s32.totalorder %s74, %s88
      %p90 = scmp.eq.s32.totalorder %s22, 0
      %p91 = por %p89, %p90
      %s93 = sadd.s32 %s92, 1
      %p96 = scmp.eq.s32.totalorder %s16, 1
      %p97 = scmp.ne.s32.totalorder %s92, %s94
      %p98 = scmp.eq.s32.totalorder %s16, 0
      %p99 = por %p97, %p98
      %p100 = scmp.ne.s32.totalorder %s92, %s94
      %p101 = scmp.eq.s32.totalorder %s21, 1
      %p102 = por %p100, %p101
      %p103 = scmp.ne.s32.totalorder %s94, %s95
      %p104 = scmp.eq.s32.totalorder %s21, 0
      %p105 = por %p103, %p104
      %p106 = scmp.ne.s32.totalorder %s94, %s95
      %p107 = scmp.eq.s32.totalorder %s22, 1
      %p108 = por %p106, %p107
      %p110 = scmp.ne.s32.totalorder %s95, %s109
      %p111 = scmp.eq.s32.totalorder %s22, 0
      %p112 = por %p110, %p111
      %s114 = sadd.s32 %s113, 1
      %p117 = scmp.eq.s32.totalorder %s16, 1
      %p118 = scmp.ne.s32.totalorder %s113, %s115
      %p119 = scmp.eq.s32.totalorder %s16, 0
      %p120 = por %p118, %p119
      %p121 = scmp.ne.s32.totalorder %s113, %s115
      %p122 = scmp.eq.s32.totalorder %s21, 1
      %p123 = por %p121, %p122
      %p124 = scmp.ne.s32.totalorder %s115, %s116
      %p125 = scmp.eq.s32.totalorder %s21, 0
      %p126 = por %p124, %p125
      %p127 = scmp.ne.s32.totalorder %s115, %s116
      %p128 = scmp.eq.s32.totalorder %s22, 1
      %p129 = por %p127, %p128
      %p131 = scmp.ne.s32.totalorder %s116, %s130
      %p132 = scmp.eq.s32.totalorder %s22, 0
      %p133 = por %p131, %p132
      %s135 = sadd.s32 %s134, 1
      %p138 = scmp.eq.s32.totalorder %s16, 1
      %p139 = scmp.ne.s32.totalorder %s134, %s136
      %p140 = scmp.eq.s32.totalorder %s16, 0
      %p141 = por %p139, %p140
      %p142 = scmp.ne.s32.totalorder %s134, %s136
      %p143 = scmp.eq.s32.totalorder %s21, 1
      %p144 = por %p142, %p143
      %p145 = scmp.ne.s32.totalorder %s136, %s137
      %p146 = scmp.eq.s32.totalorder %s21, 0
      %p147 = por %p145, %p146
      %p148 = scmp.ne.s32.totalorder %s136, %s137
      %p149 = scmp.eq.s32.totalorder %s22, 1
      %p150 = por %p148, %p149
      %p152 = scmp.ne.s32.totalorder %s137, %s151
      %p153 = scmp.eq.s32.totalorder %s22, 0
      %p154 = por %p152, %p153
      %s155 = ssub.s32 %s16, %s23
      %p156 = scmp.eq.s32.totalorder %s155, 0
      %s158 = sadd.s32 %s157, 1
      %s159 = scalar_select %p156, %s157, %s158
      %p162 = pneg %p156
      %p163 = scmp.eq.s32.totalorder %s16, 1
      %p164 = por %p162, %p163
      %p165 = scmp.ne.s32.totalorder %s157, %s160
      %p166 = scmp.eq.s32.totalorder %s16, 0
      %p167 = por %p165, %p166
      %p168 = scmp.ne.s32.totalorder %s157, %s160
      %p169 = scmp.eq.s32.totalorder %s21, 1
      %p170 = por %p168, %p169
      %p171 = scmp.ne.s32.totalorder %s160, %s161
      %p172 = scmp.eq.s32.totalorder %s21, 0
      %p173 = por %p171, %p172
      %p174 = scmp.ne.s32.totalorder %s160, %s161
      %p175 = scmp.eq.s32.totalorder %s22, 1
      %p176 = por %p174, %p175
      %p178 = scmp.ne.s32.totalorder %s161, %s177
      %p179 = scmp.eq.s32.totalorder %s22, 0
      %p180 = por %p178, %p179
      %p181 = scmp.le.s32.totalorder 1, %s16
      %p182 = scmp.lt.s32.totalorder %s16, 3
      %p183 = pnand %p181, %p182
      %p184 = pneg %p183
      // Predicated region
      $region9: #{tpu_custom_call.1} parent=5 // pred_check
        _
      $region10: #{tpu_custom_call.1} parent=5 // pred_check_branch
        %186 = sbr.rel (%p183) target = $region12
      $region11: #{tpu_custom_call.1} parent=5 // pred_region
        %s187 = ssub.s32 %s16, 1
        // Predicated region
        $region13: #{tpu_custom_call.1} parent=11 // pred_check
          %p188 = pneg %p63
        $region14: #{tpu_custom_call.1} parent=11 // pred_check_branch
          %190 = sbr.rel (%p188) target = $region16
        $region15: #{tpu_custom_call.1} parent=11 // pred_region
          _
        $region16: #{tpu_custom_call.1} parent=11 // pred_fallthru
          _
        // Predicated region
        $region17: #{tpu_custom_call.1} parent=11 // pred_check
          %p191 = pneg %p84
        $region18: #{tpu_custom_call.1} parent=11 // pred_check_branch
          %193 = sbr.rel (%p191) target = $region20
        $region19: #{tpu_custom_call.1} parent=11 // pred_region
          _
        $region20: #{tpu_custom_call.1} parent=11 // pred_fallthru
          _
        // Predicated region
        $region21: #{tpu_custom_call.1} parent=11 // pred_check
          %p194 = pneg %p105
        $region22: #{tpu_custom_call.1} parent=11 // pred_check_branch
          %196 = sbr.rel (%p194) target = $region24
        $region23: #{tpu_custom_call.1} parent=11 // pred_region
          _
        $region24: #{tpu_custom_call.1} parent=11 // pred_fallthru
          _
        // Predicated region
        $region25: #{tpu_custom_call.1} parent=11 // pred_check
          %p197 = pneg %p126
        $region26: #{tpu_custom_call.1} parent=11 // pred_check_branch
          %199 = sbr.rel (%p197) target = $region28
        $region27: #{tpu_custom_call.1} parent=11 // pred_region
          %201 = vsyncadd [#allocation4], 0
          %s202 = sshll.u32 %s4, 4
          %s203 = int_to_ptr.hbm [resolvable:$true] %s202
          %s204 = sshll.u32 [#allocation3], 4
          %s205 = int_to_ptr.vmem [resolvable:$true] %s204
          %210 = dma.hbm_to_vmem [thread:$0]  %s203, 256, %s205, [#allocation4], 64, 64, 4
        $region28: #{tpu_custom_call.1} parent=11 // pred_fallthru
          _
        // Predicated region
        $region29: #{tpu_custom_call.1} parent=11 // pred_check
          %p211 = pneg %p147
        $region30: #{tpu_custom_call.1} parent=11 // pred_check_branch
          %213 = sbr.rel (%p211) target = $region32
        $region31: #{tpu_custom_call.1} parent=11 // pred_region
          _
        $region32: #{tpu_custom_call.1} parent=11 // pred_fallthru
          _
      $region12: #{tpu_custom_call.1} parent=5 // pred_fallthru
        _
      %p214 = scmp.lt.s32.totalorder %s16, 2
      // Predicated region
      $region33: #{tpu_custom_call.1} parent=5 // pred_check
        %p215 = pneg %p214
      $region34: #{tpu_custom_call.1} parent=5 // pred_check_branch
        %217 = sbr.rel (%p215) target = $region36
      $region35: #{tpu_custom_call.1} parent=5 // pred_region
        // Predicated region
        $region37: #{tpu_custom_call.1} parent=35 // pred_check
          %p218 = pneg %p36
        $region38: #{tpu_custom_call.1} parent=35 // pred_check_branch
          %220 = sbr.rel (%p218) target = $region40
        $region39: #{tpu_custom_call.1} parent=35 // pred_region
          %s221 = smul.u32 2, %s16
          %p222 = scmp.lt.s32.totalorder %s221, 3
          %s223 = scalar_select %p222, %s221, 3
          %s224 = smul.addr %s223, 2
          %s225 = scalar_lea.vmem %s0, %s224
          %s226 = smul.u32 2, %s16
        $region40: #{tpu_custom_call.1} parent=35 // pred_fallthru
          _
      $region36: #{tpu_custom_call.1} parent=5 // pred_fallthru
        _
      %p227 = scmp.le.s32.totalorder 1, %s16
      %p228 = scmp.lt.s32.totalorder %s16, 3
      %p229 = pnand %p227, %p228
      %p230 = pneg %p229
      // Predicated region
      $region41: #{tpu_custom_call.1} parent=5 // pred_check
        _
      $region42: #{tpu_custom_call.1} parent=5 // pred_check_branch
        %232 = sbr.rel (%p229) target = $region44
      $region43: #{tpu_custom_call.1} parent=5 // pred_region
        %s233 = ssub.s32 %s16, 1
        // Predicated region
        $region45: #{tpu_custom_call.1} parent=43 // pred_check
          %p234 = pneg %p126
        $region46: #{tpu_custom_call.1} parent=43 // pred_check_branch
          %236 = sbr.rel (%p234) target = $region48
        $region47: #{tpu_custom_call.1} parent=43 // pred_region
          %238 = dma.done [#allocation4], 256
        $region48: #{tpu_custom_call.1} parent=43 // pred_fallthru
          _
        %s239 = smul.u32 2, %s21
        %p240 = scmp.lt.s32.totalorder %s239, 3
        %s241 = scalar_select %p240, %s239, 3
        %s242 = smul.addr %s241, 2
        %s243 = scalar_lea.vmem %s0, %s242
        %p244 = pneg %p42
        %p245 = pneg %p39
        %p246 = pneg %p63
        %p247 = pneg %p60
        %p248 = pneg %p84
        %p249 = pneg %p81
        %p250 = pneg %p105
        %p251 = pneg %p102
        %p252 = pneg %p126
        %p253 = pneg %p123
        %p254 = pneg %p147
        %p255 = pneg %p144
        %p256 = pneg %p173
        %p257 = pneg %p170
        %s258 = sand.u32 %s160, 1
        %s259 = scalar_lea.sflag [#allocation5], %s258
        %s260 = sand.u32 %s160, 1
        %s261 = smul.addr %s260, 16
        %s262 = scalar_lea.vmem [#allocation6], %s261
        %s263 = smul.u32 2, %s21
        %p264 = scmp.lt.s32.totalorder %s263, 3
        %s265 = scalar_select %p264, %s263, 3
        %s266 = smul.addr %s265, 2
        %s267 = scalar_lea.vmem %s0, %s266
        %s268 = smul.u32 2, %s21
        %s269 = smul.u32 2, %s21
        %v271 = vld [vmem:[%s267] sm:$0x3]
        %v272 = vld [vmem:[%s267 + $0x2] sm:$0x3]
        %v273 = vunpack.c.l.bf16 %v271
        %v274 = vunpack.c.l.bf16 %v272
        %vm275 = vcmask 142336
        %v276 = vsel %vm275, %v273, 0.0
        %277 = vadd.xlane.f32.xlu0 %v276
        %v278 = vpop.xlane.xlu0 %277
        %v279 = vsel %vm275, %v274, 0.0
        %280 = vadd.xlane.f32.xlu0 %v279
        %v281 = vpop.xlane.xlu0 %280
        %v282 = vmul.f32 %v278, 0.0625
        %v283 = vmul.f32 %v281, 0.0625
        %v284 = vld [vmem:[%s1] sm:$0xf]
        %v287 = vlaneseq
        %v288 = vand.u32 %v287, 127
        %v289 = vperm.slane %v282, %v288
        %v290 = vperm.slane %v283, %v288
        %vm291 = vcmask 1041409
        %v292 = vsel %vm291, %v290, %v289
        %vm293 = vcmask 31744
        %v294 = vsel %vm293, %v292, 0
        %vm296 = vcmask 1043456
        %v298 = vsel %vm296, %v284, 0
        %300 = vmatpush.msra.mxu0 0.0
        %301 = vmatpush.msra.mxu0 0.0
        %302 = vmatpush.msra.mxu0 0.0
        %303 = vmatpush.msra.mxu0 0.0
        %304 = vmatpush.msra.mxu0 0.0
        %305 = vmatpush.msra.mxu0 0.0
        %306 = vmatpush.msra.mxu0 0.0
        %307 = vmatpush.msra.mxu0 0.0
        %308 = vmatpush.msra.mxu0 0.0
        %309 = vmatpush.msra.mxu0 0.0
        %310 = vmatpush.msra.mxu0 0.0
        %311 = vmatpush.msra.mxu0 0.0
        %312 = vmatpush.msra.mxu0 0.0
        %313 = vmatpush.msra.mxu0 0.0
        %314 = vmatpush.msra.mxu0 0.0
        %315 = vmatpush.msra.mxu0 %v298
        %316 = vmatmul.f32.gmra.mxu0 %v294
        %v317 = vpop.f32.mrf.mxu0
        %v318 = vadd.f32 0.0, %v317
        %319 = vdwg.mxu0
        %v320 = vmax.f32 %v318, 0.0
        %v321 = vld [vmem:[%s2] sm:$0x3]
        %v322 = vld [vmem:[%s3] sm:$0x1]
        %v324 = vperm.slane %v322, 0
        %vm326 = vcmask 15360
        %v328 = vsel %vm326, %v320, 0
        %vm330 = vcmask 1041408
        %v332 = vsel %vm330, %v321, 0
        %334 = vmatpush.msra.mxu0 0.0
        %335 = vmatpush.msra.mxu0 0.0
        %336 = vmatpush.msra.mxu0 0.0
        %337 = vmatpush.msra.mxu0 0.0
        %338 = vmatpush.msra.mxu0 0.0
        %339 = vmatpush.msra.mxu0 0.0
        %340 = vmatpush.msra.mxu0 0.0
        %341 = vmatpush.msra.mxu0 0.0
        %342 = vmatpush.msra.mxu0 0.0
        %343 = vmatpush.msra.mxu0 0.0
        %344 = vmatpush.msra.mxu0 0.0
        %345 = vmatpush.msra.mxu0 0.0
        %346 = vmatpush.msra.mxu0 0.0
        %347 = vmatpush.msra.mxu0 0.0
        %348 = vmatpush.msra.mxu0 0.0
        %349 = vmatpush.msra.mxu0 %v332
        %350 = vmatmul.f32.gmra.mxu0 %v328
        %v351 = vpop.f32.mrf.mxu0
        %v352 = vadd.f32 %v324, %v351
        %353 = vdwg.mxu0
        %v354 = vmul.f32 %v352, 0.029411765
        %vm355 = vcmask 25600
        %v356 = vsel %vm355, %v354, -inf
        %357 = vmax.xlane.f32.xlu0 %v356
        %v358 = vpop.xlane.xlu0 %357
        %v359 = vsub.f32 %v354, %v358
        %v360 = vmul.f32 %v359, 1.442695
        %v361 = vpow.pop %v360
        %v362 = vsel %vm355, %v361, 0.0
        %363 = vadd.xlane.f32.xlu0 %v362
        %v364 = vpop.xlane.xlu0 %363
        %v365 = vrcp.pop %v364
        %v366 = vmul.f32 %v364, %v365
        %v367 = vsub.f32 1.0, %v366
        %v368 = vmul.f32 %v365, %v367
        %v369 = vadd.f32 %v365, %v368
        %vm370 = vweird.f32 %v364
        %vm371 = vweird.f32 %v365
        %vm372 = vmor %vm370, %vm371
        %v373 = vsel %vm372, %v365, %v369
        %v374 = vand.u32 2147483647, %v364
        %vm375 = vcmp.eq.f32.partialorder %v374, 8.507059e+37
        %v376 = vand.u32 %v364, 2147483648
        %v377 = vor.u32 1.1754944e-38, %v376
        %v378 = vsel %vm375, %v377, %v373
        %v379 = vmul.f32 %v361, %v378
        %v380 = vld [vmem:[#allocation3] sm:$0xf]
        %v381 = vld [vmem:[#allocation3 + $0x4] sm:$0xf]
        %v382 = vld [vmem:[#allocation3 + $0x8] sm:$0xf]
        %v383 = vld [vmem:[#allocation3 + $0xc] sm:$0xf]
        %v384 = vld [vmem:[%s5] sm:$0xff]
        %v385 = vunpack.c.l.bf16 %v380
        %s387 = vtos %v379
        %v388 = vstv %s387
        %v390 = vmul.f32 %v388, %v385
        %v391 = vunpack.c.l.bf16 %v381
        %392 = vrot.lane.b32.xlu0 %v379, 127
        %v393 = vpop.permute.xlu0 %392
        %s394 = vtos %v393
        %v395 = vstv %s394
        %v397 = vmul.f32 %v395, %v391
        %v398 = vadd.f32 %v390, %v397
        %v399 = vunpack.c.l.bf16 %v382
        %400 = vrot.lane.b32.xlu0 %v379, 126
        %v401 = vpop.permute.xlu0 %400
        %s402 = vtos %v401
        %v403 = vstv %s402
        %v405 = vmul.f32 %v403, %v399
        %v406 = vadd.f32 %v398, %v405
        %v407 = vunpack.c.l.bf16 %v383
        %408 = vrot.lane.b32.xlu0 %v379, 125
        %v409 = vpop.permute.xlu0 %408
        %s410 = vtos %v409
        %v411 = vstv %s410
        %v413 = vmul.f32 %v411, %v407
        %v414 = vadd.f32 %v406, %v413
        %v415 = vpack.c.bf16 %v414, %v414
        %vm416 = vcmask 123904
        %417 = vst.msk [vmem:[#allocation2] sm:$0x3] %vm416, %v271
        %s419 = scalar_lea.vmem [#allocation1], 1
        %420 = vst [vmem:[%s419] ss:$2 sm:$0xff] %v271
        %v421 = vld.sshfl [vmem:[#allocation1] sm:$0xff pattern:$0x75643120]
        %423 = vrot.lane.b32.xlu0 %v421, 127
        %v424 = vpop.permute.xlu0 %423
        %vm426 = vcmask 125954
        %427 = vst.msk [vmem:[#allocation2] sm:$0xc] %vm426, %v424
        %428 = vst [vmem:[#allocation1] ss:$2 sm:$0xff] %v271
        %v429 = vld.sshfl [vmem:[#allocation1] sm:$0xff pattern:$0x75643120]
        %431 = vrot.lane.b32.xlu0 %v429, 126
        %v432 = vpop.permute.xlu0 %431
        %434 = vst.msk [vmem:[#allocation2 + $0x4] sm:$0x3] %vm416, %v432
        %v435 = vld [vmem:[#allocation2] sm:$0xf]
        %v436 = vld [vmem:[#allocation2 + $0x4] sm:$0x3]
        %v437 = vperm.slane %v379, 0
        %v438 = vmul.f32 %v384, %v437
        %v439 = vsel %vm293, %v438, 0.0
        %440 = vadd.xlane.f32.xlu0 %v439
        %v441 = vpop.xlane.xlu0 %440
        %v444 = vunpack.c.l.b16 %v435
        %v445 = vunpack.c.l.b16 %v436
        %v446 = vpack.c.b16 %v445, %v444
        %vm447 = vcmask 97280
        %v449 = vsel %vm447, %v415, 0
        %vm451 = vcmask 1045504
        %v453 = vsel %vm451, %v446, 0
        %455 = vmatpush.bf16.msra.mxu0 0
        %456 = vmatpush.bf16.msra.mxu0 0
        %457 = vmatpush.bf16.msra.mxu0 0
        %458 = vmatpush.bf16.msra.mxu0 0
        %459 = vmatpush.bf16.msra.mxu0 0
        %460 = vmatpush.bf16.msra.mxu0 0
        %461 = vmatpush.bf16.msra.mxu0 0
        %462 = vmatpush.bf16.msra.mxu0 %v453
        %463 = vmatmul.bf16.gmra.mxu0 %v449
        %v464 = vpop.f32.mrf.mxu0
        %v465 = vadd.f32 %v441, %v464
        %v466 = vpop.f32.mrf.mxu0
        %467 = vdwg.mxu0
        %vm468 = vcmask 130048
        %469 = vst.msk [vmem:[%s262] sm:$0xff] %vm468, %v465
        %v470 = vrot.slane %v379, 1
        %s471 = vtos %v470
        %v472 = vstv %s471
        %v474 = vmul.f32 %v472, %v385
        %475 = vrot.lane.b32.xlu0 %v470, 127
        %v476 = vpop.permute.xlu0 %475
        %s477 = vtos %v476
        %v478 = vstv %s477
        %v480 = vmul.f32 %v478, %v391
        %v481 = vadd.f32 %v474, %v480
        %482 = vrot.lane.b32.xlu0 %v470, 126
        %v483 = vpop.permute.xlu0 %482
        %s484 = vtos %v483
        %v485 = vstv %s484
        %v487 = vmul.f32 %v485, %v399
        %v488 = vadd.f32 %v481, %v487
        %489 = vrot.lane.b32.xlu0 %v470, 125
        %v490 = vpop.permute.xlu0 %489
        %s491 = vtos %v490
        %v492 = vstv %s491
        %v494 = vmul.f32 %v492, %v407
        %v495 = vadd.f32 %v488, %v494
        %v496 = vpack.c.bf16 %v495, %v495
        %497 = vst.msk [vmem:[#allocation2] sm:$0x3] %vm416, %v272
        %s499 = scalar_lea.vmem [#allocation1], 1
        %500 = vst [vmem:[%s499] ss:$2 sm:$0xff] %v272
        %v501 = vld.sshfl [vmem:[#allocation1] sm:$0xff pattern:$0x75643120]
        %503 = vrot.lane.b32.xlu0 %v501, 127
        %v504 = vpop.permute.xlu0 %503
        %506 = vst.msk [vmem:[#allocation2] sm:$0xc] %vm426, %v504
        %507 = vst [vmem:[#allocation1] ss:$2 sm:$0xff] %v272
        %v508 = vld.sshfl [vmem:[#allocation1] sm:$0xff pattern:$0x75643120]
        %510 = vrot.lane.b32.xlu0 %v508, 126
        %v511 = vpop.permute.xlu0 %510
        %513 = vst.msk [vmem:[#allocation2 + $0x4] sm:$0x3] %vm416, %v511
        %v514 = vld [vmem:[#allocation2] sm:$0xf]
        %v515 = vld [vmem:[#allocation2 + $0x4] sm:$0x3]
        %v516 = vperm.slane %v379, 1
        %v517 = vmul.f32 %v384, %v516
        %v518 = vsel %vm293, %v517, 0.0
        %519 = vadd.xlane.f32.xlu0 %v518
        %v520 = vpop.xlane.xlu0 %519
        %v523 = vunpack.c.l.b16 %v514
        %v524 = vunpack.c.l.b16 %v515
        %v525 = vpack.c.b16 %v524, %v523
        %v527 = vsel %vm447, %v496, 0
        %v530 = vsel %vm451, %v525, 0
        %532 = vmatpush.bf16.msra.mxu0 0
        %533 = vmatpush.bf16.msra.mxu0 0
        %534 = vmatpush.bf16.msra.mxu0 0
        %535 = vmatpush.bf16.msra.mxu0 0
        %536 = vmatpush.bf16.msra.mxu0 0
        %537 = vmatpush.bf16.msra.mxu0 0
        %538 = vmatpush.bf16.msra.mxu0 0
        %539 = vmatpush.bf16.msra.mxu0 %v530
        %540 = vmatmul.bf16.gmra.mxu0 %v527
        %v541 = vpop.f32.mrf.mxu0
        %v542 = vadd.f32 %v520, %v541
        %v543 = vpop.f32.mrf.mxu0
        %544 = vdwg.mxu0
        %s545 = scalar_lea.vmem %s262, 8 [#allocation6]
        %546 = vst.msk [vmem:[%s545] sm:$0xff] %vm468, %v542
        %s547 = sand.u32 %s160, 1
        %s548 = scalar_lea.sflag [#allocation5], %s547
        %s549 = sand.u32 %s160, 1
        %s550 = smul.addr %s549, 16
        %s551 = scalar_lea.vmem [#allocation6], %s550
        // Predicated region
        $region49: #{tpu_custom_call.1} parent=43 // pred_check
          %p552 = pneg %p170
        $region50: #{tpu_custom_call.1} parent=43 // pred_check_branch
          %554 = sbr.rel (%p552) target = $region52
        $region51: #{tpu_custom_call.1} parent=43 // pred_region
          %s555 = smul.u32 2, %s21
          %557 = vsyncadd %s548, 0
          %s558 = smul.addr %s555, 8
          %s559 = scalar_lea.hbm %s6, %s558
          %s560 = sshll.u32 %s551, 4
          %s561 = int_to_ptr.vmem [resolvable:$true] %s560
          %s562 = sshll.u32 %s559, 4
          %s563 = int_to_ptr.hbm [resolvable:$true] %s562
          %568 = dma.vmem_to_hbm [thread:$0]  %s561, 256, %s563, %s548, 128, 128, 8
        $region52: #{tpu_custom_call.1} parent=43 // pred_fallthru
          _
      $region44: #{tpu_custom_call.1} parent=5 // pred_fallthru
        _
      %p569 = scmp.le.s32.totalorder 2, %s16
      // Predicated region
      $region53: #{tpu_custom_call.1} parent=5 // pred_check
        %p570 = pneg %p569
      $region54: #{tpu_custom_call.1} parent=5 // pred_check_branch
        %572 = sbr.rel (%p570) target = $region56
      $region55: #{tpu_custom_call.1} parent=5 // pred_region
        %s573 = ssub.s32 %s16, 2
        // Predicated region
        $region57: #{tpu_custom_call.1} parent=55 // pred_check
          %p574 = pneg %p176
        $region58: #{tpu_custom_call.1} parent=55 // pred_check_branch
          %576 = sbr.rel (%p574) target = $region60
        $region59: #{tpu_custom_call.1} parent=55 // pred_region
          %s577 = sand.u32 %s161, 1
          %s578 = scalar_lea.sflag [#allocation5], %s577
          %s579 = sand.u32 %s161, 1
          %s580 = smul.addr %s579, 16
          %s581 = scalar_lea.vmem [#allocation6], %s580
          %583 = dma.done %s578, 256
        $region60: #{tpu_custom_call.1} parent=55 // pred_fallthru
          _
      $region56: #{tpu_custom_call.1} parent=5 // pred_fallthru
        _
    $region6: #{tpu_custom_call.1} parent=1 // loop_footer
      %s20 = sadd.s32 1, %s16
    $region7: #{tpu_custom_call.1} parent=1 // loop_footer_branch
      %15 = sbr.rel target = $region3
    $region8: #{tpu_custom_call.1} parent=1 // loop_exit
      _
    %584 = vsyncpa [#allocation4], 1
    %s585 = scalar_lea.sflag [#allocation4], 1
    %586 = vsyncpa %s585, 1
    %587 = vsyncpa [#allocation5], 1
    %s588 = scalar_lea.sflag [#allocation5], 1
    %589 = vsyncpa %s588, 1

</llo_original>
